<compile_context>
chip_gen: v6e
topology: v6e:2x2x1
jax: 0.10.0
libtpu: 0.0.40
codegen_flags: <defaults>
</compile_context>

<pallas_src>
import re
import functools

import numpy as np
import jax
import jax.numpy as jnp
from jax.experimental import pallas as pl
from jax.experimental.pallas import tpu as pltpu


# ----------------------------------------------------------------------------
# Pallas kernel: feature-major 4-layer MLP, batch tile on the lane axis.
#   h1 = relu(W1 x + b1); h2 = relu(W2 h1 + b2); h3 = relu(W3 h2 + b3)
#   q  = w4 . h3 + b4            (16 -> 1 done on VPU/XLU, not the MXU)
# ----------------------------------------------------------------------------
def _qfunc_mlp_kernel(bf16_epilogue,
                      x_ref,      # (in_pad, TILE_B) bf16 (zero-padded features)
                      w1_ref,     # (128, in_pad)    bf16
                      b1_ref,     # (128, 1)         f32
                      w2_ref,     # (64, 128)        bf16
                      b2_ref,     # (64, 1)          f32
                      w3_ref,     # (16, 64)         bf16
                      b3_ref,     # (16, 1)          f32
                      w4_ref,     # (16, 1)          f32
                      b4_ref,     # (1, 1)           f32 in SMEM
                      out_ref):   # (1, TILE_B)      f32 (lane-dense)
    # v6e/v7x: bf16 VPU -> do bias+ReLU in bf16 (half the VALU work / vreg
    # pressure).  v5e: no bf16 VPU -> keep the epilogues in f32.
    act_dtype = jnp.bfloat16 if bf16_epilogue else jnp.float32

    def bias_relu(h32, b_ref):
        h = h32.astype(act_dtype) + b_ref[...].astype(act_dtype)
        return jnp.maximum(h, jnp.zeros((), act_dtype))

    x = x_ref[...]                                                      # (in_pad, TB) bf16
    # Layer 1
    h = jnp.dot(w1_ref[...], x, preferred_element_type=jnp.float32)     # (128, TB) f32
    h = bias_relu(h, b1_ref).astype(jnp.bfloat16)
    # Layer 2
    h = jnp.dot(w2_ref[...], h, preferred_element_type=jnp.float32)     # (64, TB)
    h = bias_relu(h, b2_ref).astype(jnp.bfloat16)
    # Layer 3
    h = jnp.dot(w3_ref[...], h, preferred_element_type=jnp.float32)     # (16, TB)
    h = bias_relu(h, b3_ref)                                            # (16, TB)
    # Layer 4 (16 -> 1): VPU multiply + sublane reduce, lane-dense (1, TB) row.
    q = jnp.sum(h.astype(jnp.float32) * w4_ref[...], axis=0, keepdims=True)
    out_ref[...] = q + b4_ref[0, 0]


@functools.partial(jax.jit, static_argnames=("tile_b", "bf16_epilogue"))
def qfunc_forward_pallas(x_fm, params, *, tile_b, bf16_epilogue):
    """x_fm: (in_pad, b_pad) bf16 feature-major input -> (b_pad, 1) f32 Q values."""
    in_pad, b_pad = x_fm.shape
    assert b_pad % tile_b == 0
    num_tiles = b_pad // tile_b

    vmem = pltpu.MemorySpace.VMEM
    smem = pltpu.MemorySpace.SMEM

    def resident(shape):
        # Whole array as one block, same block every grid step -> DMA'd once,
        # VMEM-resident across the batch grid.
        return pl.BlockSpec(shape, lambda i: (0, 0), memory_space=vmem)

    # Only raise the scoped-VMEM limit when a very large tile needs it.
    act_bytes = 2 if bf16_epilogue else 4
    est_bytes = (tile_b * (128 + 64 + 16) * 4          # f32 MXU results
                 + tile_b * (128 + 64 + 16) * act_bytes  # epilogue activations
                 + 2 * in_pad * tile_b * 2             # double-buffered bf16 x tiles
                 + 2 * tile_b * 4                      # double-buffered f32 out tiles
                 + (1 << 16))                          # weights / misc slack
    vmem_limit = None
    if est_bytes > 12 * 1024 * 1024:
        vmem_limit = min(2 * est_bytes, 56 * 1024 * 1024)  # stay under v7x's 64 MiB

    out = pl.pallas_call(
        functools.partial(_qfunc_mlp_kernel, bf16_epilogue),
        out_shape=jax.ShapeDtypeStruct((1, b_pad), jnp.float32),
        grid=(num_tiles,),
        in_specs=[
            pl.BlockSpec((in_pad, tile_b), lambda i: (0, i), memory_space=vmem),
            resident(params["w1t"].shape),
            resident(params["b1c"].shape),
            resident(params["w2t"].shape),
            resident(params["b2c"].shape),
            resident(params["w3t"].shape),
            resident(params["b3c"].shape),
            resident(params["w4c"].shape),
            pl.BlockSpec(memory_space=smem),          # b4 scalar
        ],
        out_specs=pl.BlockSpec((1, tile_b), lambda i: (0, i), memory_space=vmem),
        compiler_params=pltpu.CompilerParams(
            dimension_semantics=("parallel",),        # megacore sharding on v7x
            vmem_limit_bytes=vmem_limit,
        ),
    )(x_fm,
      params["w1t"], params["b1c"], params["w2t"], params["b2c"],
      params["w3t"], params["b3c"], params["w4c"], params["b4"])

    return out.reshape(b_pad, 1)


# ----------------------------------------------------------------------------
# Batch bucketing / tiling choice (compile-cache friendly).
# ----------------------------------------------------------------------------
_MIN_BPAD = 256  # >= 2 lane tiles -> grid always has >= 2 steps (v7x megacore)


def _choose_tiling(batch, max_tile_b):
    b_pad = max(_MIN_BPAD, 1 << (max(int(batch), 1) - 1).bit_length())  # pow2 bucket
    tile_b = min(max_tile_b, b_pad // 2)      # both powers of two -> tile_b | b_pad
    return b_pad, tile_b


def _use_bf16_epilogue():
    try:
        kind = jax.devices()[0].device_kind.lower()
    except Exception:
        return False
    return ("v6" in kind) or ("v7" in kind)   # bf16-capable VPU; v5e & older -> f32


# ----------------------------------------------------------------------------
# Frame / QFunction glue (host-side, matches the PyTorch reference semantics).
# ----------------------------------------------------------------------------
class QFunctionPallas:
    def __init__(self, N, key, max_tile_b=2048):
        self.N = N
        # max_tile_b should be a power-of-two multiple of 128 (default 2048,
        # v5e-safe per the perf review; raise to 4096 on v6e/v7x if desired).
        self.max_tile_b = max(128, 1 << (int(max_tile_b) - 1).bit_length())
        self.bf16_epilogue = _use_bf16_epilogue()

        self.in_dim = N + N + 3
        self.in_pad = ((self.in_dim + 31) // 32) * 32   # pad contraction dim

        dims = [(self.in_dim, 128), (128, 64), (64, 16), (16, 1)]
        keys = jax.random.split(key, 2 * len(dims))
        raw = []
        for i, (fan_in, fan_out) in enumerate(dims):
            # deterministic init mimicking nn.Linear default (uniform +-1/sqrt(fan_in))
            bound = 1.0 / (fan_in ** 0.5)
            w = jax.random.uniform(keys[2 * i], (fan_in, fan_out),
                                   minval=-bound, maxval=bound, dtype=jnp.float32)
            b = jax.random.uniform(keys[2 * i + 1], (1, fan_out),
                                   minval=-bound, maxval=bound, dtype=jnp.float32)
            raw.append((w, b))
        (w1, b1), (w2, b2), (w3, b3), (w4, b4) = raw

        w1t = jnp.pad(w1.T, ((0, 0), (0, self.in_pad - self.in_dim)))   # (128, in_pad)
        self.params = {
            # feature-major (transposed) weights; bf16 for the MXU, f32 biases
            "w1t": w1t.astype(jnp.bfloat16),            # (128, in_pad)
            "b1c": b1.T,                                 # (128, 1) f32
            "w2t": w2.T.astype(jnp.bfloat16),            # (64, 128)
            "b2c": b2.T,                                 # (64, 1)  f32
            "w3t": w3.T.astype(jnp.bfloat16),            # (16, 64)
            "b3c": b3.T,                                 # (16, 1)  f32
            "w4c": w4,                                   # (16, 1)  f32 (VPU layer 4)
            "b4":  b4,                                   # (1, 1)   f32 (SMEM)
        }

    # ---- Frame (host-side string parsing, same semantics as reference) ----
    @staticmethod
    def _f(tok):
        if tok == 'NOP':
            return 1
        elif tok == 'LHLD':
            return 2
        elif tok == 'SHLD':
            return 3
        else:
            return -1

    @staticmethod
    def _filter(program):
        return re.findall(r'\b[A-Z]+\b', program)

    def _program2numbers(self, program):
        toks = self._filter(program)
        return [self._f(t) for t in toks[:-1]]

    # ---- feature builder: feature-major, batch- & feature-padded, bf16 ----
    def _build_features(self, programs, action):
        B = len(programs)
        b_pad, tile_b = _choose_tiling(B, self.max_tile_b)
        x = np.zeros((self.in_pad, b_pad), dtype=np.float32)
        lines = list(action['line'])
        changes = list(action['change'])
        for i, prog in enumerate(programs):
            nums = self._program2numbers(prog)[: self.N]      # program padding vect
            if nums:
                x[: len(nums), i] = nums
            x[self.N + int(lines[i]), i] = 1.0                # linerep one-hot
            x[2 * self.N + int(changes[i]), i] = 1.0          # changerep one-hot
        # bf16 cast on host: program numbers (1..3) and one-hots are exact in bf16.
        return x.astype(jnp.bfloat16), B, b_pad, tile_b

    # ---- forward ----
    def forward(self, programs, action):
        x_np, B, b_pad, tile_b = self._build_features(programs, action)
        x_fm = jnp.asarray(x_np)                              # single device transfer
        q = qfunc_forward_pallas(x_fm, self.params,
                                 tile_b=tile_b, bf16_epilogue=self.bf16_epilogue)
        return q[:B]                                          # drop batch padding


# ----------------------------------------------------------------------------
def _ref_forward(params, x_np, B):
    """Pure-JAX reference (same bf16 weights, f32 math) for a tolerance check."""
    x = jnp.asarray(np.asarray(x_np[:, :B], dtype=np.float32))          # (in_pad, B)
    h = jnp.maximum(params["w1t"].astype(jnp.float32) @ x + params["b1c"], 0.0)
    h = jnp.maximum(params["w2t"].astype(jnp.float32) @ h + params["b2c"], 0.0)
    h = jnp.maximum(params["w3t"].astype(jnp.float32) @ h + params["b3c"], 0.0)
    q = jnp.sum(h * params["w4c"], axis=0, keepdims=True) + params["b4"][0, 0]
    return q.T                                                          # (B, 1)


if __name__ == "__main__":
    N = 8
    key = jax.random.PRNGKey(0)
    qf = QFunctionPallas(N, key)

    # Small deterministic example: batch of 2 programs + an action dict.
    programs = [
        "NOP 7e87e8\nLHLD 7e87e8\nSHLD 7e87e8\nHLT",
        "LHLD 7e87e8\nNOP 7e87e8\nHLT",
    ]
    action = {"line": [0, 3], "change": [1, 2]}

    q_values = qf.forward(programs, action)                   # (2, 1)
    q_values = jax.block_until_ready(q_values)

    assert q_values.shape == (2, 1)
    assert q_values.dtype == jnp.float32

    # Correctness check against a pure-JAX reference (bf16 weight / activation
    # drift only -> generous tolerance).
    x_np, B, _, _ = qf._build_features(programs, action)
    q_ref = jax.block_until_ready(_ref_forward(qf.params, x_np, B))
    np.testing.assert_allclose(np.asarray(q_values), np.asarray(q_ref),
                               rtol=5e-2, atol=5e-2)

    print("KERNEL_OK")
</pallas_src>

<mosaic_0001>
module attributes {stable_mosaic.version = 11 : i64} {
  func.func @_qfunc_mlp_kernel(%arg0: i32, %arg1: memref<32x128xbf16, #tpu.memory_space<vmem>>, %arg2: memref<128x32xbf16, #tpu.memory_space<vmem>>, %arg3: memref<128x1xf32, #tpu.memory_space<vmem>>, %arg4: memref<64x128xbf16, #tpu.memory_space<vmem>>, %arg5: memref<64x1xf32, #tpu.memory_space<vmem>>, %arg6: memref<16x64xbf16, #tpu.memory_space<vmem>>, %arg7: memref<16x1xf32, #tpu.memory_space<vmem>>, %arg8: memref<16x1xf32, #tpu.memory_space<vmem>>, %arg9: memref<1x1xf32, #tpu.memory_space<smem>>, %arg10: memref<1x128xf32, #tpu.memory_space<vmem>>) attributes {dimension_semantics = [#tpu.dimension_semantics<parallel>], iteration_bounds = array<i64: 2>, scalar_prefetch = 0 : i64, scratch_operands = 0 : i64, tpu.core_type = #tpu.core_type<tc>, window_params = [{transform_indices = @transform_0, window_bounds = array<i64: 32, 128>}, {pipeline_mode = #tpu.pipeline_mode<synchronous>, transform_indices = @transform_1, window_bounds = array<i64: 128, 32>}, {pipeline_mode = #tpu.pipeline_mode<synchronous>, transform_indices = @transform_2, window_bounds = array<i64: 128, 1>}, {pipeline_mode = #tpu.pipeline_mode<synchronous>, transform_indices = @transform_3, window_bounds = array<i64: 64, 128>}, {pipeline_mode = #tpu.pipeline_mode<synchronous>, transform_indices = @transform_4, window_bounds = array<i64: 64, 1>}, {pipeline_mode = #tpu.pipeline_mode<synchronous>, transform_indices = @transform_5, window_bounds = array<i64: 16, 64>}, {pipeline_mode = #tpu.pipeline_mode<synchronous>, transform_indices = @transform_6, window_bounds = array<i64: 16, 1>}, {pipeline_mode = #tpu.pipeline_mode<synchronous>, transform_indices = @transform_7, window_bounds = array<i64: 16, 1>}, {transform_indices = @transform_8, window_bounds = array<i64: 1, 1>}, {transform_indices = @transform_9, window_bounds = array<i64: 1, 128>}]} {
    %c0 = arith.constant 0 : index
    %c0_0 = arith.constant 0 : index
    %0 = vector.load %arg1[%c0, %c0_0] : memref<32x128xbf16, #tpu.memory_space<vmem>>, vector<32x128xbf16>
    %c0_1 = arith.constant 0 : index
    %c0_2 = arith.constant 0 : index
    %1 = vector.load %arg2[%c0_1, %c0_2] : memref<128x32xbf16, #tpu.memory_space<vmem>>, vector<128x32xbf16>
    %cst = arith.constant dense<0.000000e+00> : vector<128x128xf32>
    %2 = tpu.matmul %1, %0, %cst {dimension_numbers = #tpu.dot_dimension_numbers<[1], [0], [0], [1], [0, 0, 1, 1], [], []>} : vector<128x32xbf16>, vector<32x128xbf16>, vector<128x128xf32> -> vector<128x128xf32>
    %c0_3 = arith.constant 0 : index
    %c0_4 = arith.constant 0 : index
    %3 = vector.load %arg3[%c0_3, %c0_4] : memref<128x1xf32, #tpu.memory_space<vmem>>, vector<128x1xf32>
    %4 = vector.broadcast %3 : vector<128x1xf32> to vector<128x128xf32>
    %5 = arith.addf %2, %4 : vector<128x128xf32>
    %cst_5 = arith.constant 0.000000e+00 : f32
    %6 = vector.broadcast %cst_5 : f32 to vector<128x128xf32>
    %7 = arith.maximumf %5, %6 : vector<128x128xf32>
    %8 = arith.truncf %7 : vector<128x128xf32> to vector<128x128xbf16>
    %c0_6 = arith.constant 0 : index
    %c0_7 = arith.constant 0 : index
    %9 = vector.load %arg4[%c0_6, %c0_7] : memref<64x128xbf16, #tpu.memory_space<vmem>>, vector<64x128xbf16>
    %cst_8 = arith.constant dense<0.000000e+00> : vector<64x128xf32>
    %10 = tpu.matmul %9, %8, %cst_8 {dimension_numbers = #tpu.dot_dimension_numbers<[1], [0], [0], [1], [0, 0, 1, 1], [], []>} : vector<64x128xbf16>, vector<128x128xbf16>, vector<64x128xf32> -> vector<64x128xf32>
    %c0_9 = arith.constant 0 : index
    %c0_10 = arith.constant 0 : index
    %11 = vector.load %arg5[%c0_9, %c0_10] : memref<64x1xf32, #tpu.memory_space<vmem>>, vector<64x1xf32>
    %12 = vector.broadcast %11 : vector<64x1xf32> to vector<64x128xf32>
    %13 = arith.addf %10, %12 : vector<64x128xf32>
    %cst_11 = arith.constant 0.000000e+00 : f32
    %14 = vector.broadcast %cst_11 : f32 to vector<64x128xf32>
    %15 = arith.maximumf %13, %14 : vector<64x128xf32>
    %16 = arith.truncf %15 : vector<64x128xf32> to vector<64x128xbf16>
    %c0_12 = arith.constant 0 : index
    %c0_13 = arith.constant 0 : index
    %17 = vector.load %arg6[%c0_12, %c0_13] : memref<16x64xbf16, #tpu.memory_space<vmem>>, vector<16x64xbf16>
    %cst_14 = arith.constant dense<0.000000e+00> : vector<16x128xf32>
    %18 = tpu.matmul %17, %16, %cst_14 {dimension_numbers = #tpu.dot_dimension_numbers<[1], [0], [0], [1], [0, 0, 1, 1], [], []>} : vector<16x64xbf16>, vector<64x128xbf16>, vector<16x128xf32> -> vector<16x128xf32>
    %c0_15 = arith.constant 0 : index
    %c0_16 = arith.constant 0 : index
    %19 = vector.load %arg7[%c0_15, %c0_16] : memref<16x1xf32, #tpu.memory_space<vmem>>, vector<16x1xf32>
    %20 = vector.broadcast %19 : vector<16x1xf32> to vector<16x128xf32>
    %21 = arith.addf %18, %20 : vector<16x128xf32>
    %cst_17 = arith.constant 0.000000e+00 : f32
    %22 = vector.broadcast %cst_17 : f32 to vector<16x128xf32>
    %23 = arith.maximumf %21, %22 : vector<16x128xf32>
    %c0_18 = arith.constant 0 : index
    %c0_19 = arith.constant 0 : index
    %24 = vector.load %arg8[%c0_18, %c0_19] : memref<16x1xf32, #tpu.memory_space<vmem>>, vector<16x1xf32>
    %25 = vector.broadcast %24 : vector<16x1xf32> to vector<16x128xf32>
    %26 = arith.mulf %23, %25 : vector<16x128xf32>
    %cst_20 = arith.constant dense<0.000000e+00> : vector<128xf32>
    %27 = vector.multi_reduction <add>, %26, %cst_20 [0] : vector<16x128xf32> to vector<128xf32>
    %28 = vector.shape_cast %27 : vector<128xf32> to vector<1x128xf32>
    %c0_21 = arith.constant 0 : index
    %c0_22 = arith.constant 0 : index
    %29 = memref.load %arg9[%c0_21, %c0_22] : memref<1x1xf32, #tpu.memory_space<smem>>
    %30 = vector.broadcast %29 : f32 to vector<1x128xf32>
    %31 = arith.addf %28, %30 : vector<1x128xf32>
    %c0_23 = arith.constant 0 : index
    %c0_24 = arith.constant 0 : index
    %32 = vector.load %arg10[%c0_23, %c0_24] : memref<1x128xf32, #tpu.memory_space<vmem>>, vector<1x128xf32>
    tpu.vector_store %arg10[%c0_23, %c0_24], %31 {strides = array<i32>} : memref<1x128xf32, #tpu.memory_space<vmem>>, vector<1x128xf32>,
    return
  }
  func.func @transform_0(%arg0: i32) -> (i32, i32) {
    %c0_i32 = arith.constant 0 : i32
    %c0_i32_0 = arith.constant 0 : i32
    return %c0_i32, %arg0 : i32, i32
  }
  func.func @transform_1(%arg0: i32) -> (i32, i32) {
    %c0_i32 = arith.constant 0 : i32
    %c0_i32_0 = arith.constant 0 : i32
    %c0_i32_1 = arith.constant 0 : i32
    return %c0_i32, %c0_i32_0 : i32, i32
  }
  func.func @transform_2(%arg0: i32) -> (i32, i32) {
    %c0_i32 = arith.constant 0 : i32
    %c0_i32_0 = arith.constant 0 : i32
    %c0_i32_1 = arith.constant 0 : i32
    return %c0_i32, %c0_i32_0 : i32, i32
  }
  func.func @transform_3(%arg0: i32) -> (i32, i32) {
    %c0_i32 = arith.constant 0 : i32
    %c0_i32_0 = arith.constant 0 : i32
    %c0_i32_1 = arith.constant 0 : i32
    return %c0_i32, %c0_i32_0 : i32, i32
  }
  func.func @transform_4(%arg0: i32) -> (i32, i32) {
    %c0_i32 = arith.constant 0 : i32
    %c0_i32_0 = arith.constant 0 : i32
    %c0_i32_1 = arith.constant 0 : i32
    return %c0_i32, %c0_i32_0 : i32, i32
  }
  func.func @transform_5(%arg0: i32) -> (i32, i32) {
    %c0_i32 = arith.constant 0 : i32
    %c0_i32_0 = arith.constant 0 : i32
    %c0_i32_1 = arith.constant 0 : i32
    return %c0_i32, %c0_i32_0 : i32, i32
  }
  func.func @transform_6(%arg0: i32) -> (i32, i32) {
    %c0_i32 = arith.constant 0 : i32
    %c0_i32_0 = arith.constant 0 : i32
    %c0_i32_1 = arith.constant 0 : i32
    return %c0_i32, %c0_i32_0 : i32, i32
  }
  func.func @transform_7(%arg0: i32) -> (i32, i32) {
    %c0_i32 = arith.constant 0 : i32
    %c0_i32_0 = arith.constant 0 : i32
    %c0_i32_1 = arith.constant 0 : i32
    return %c0_i32, %c0_i32_0 : i32, i32
  }
  func.func @transform_8(%arg0: i32) -> (i32, i32) {
    %c0_i32 = arith.constant 0 : i32
    %c0_i32_0 = arith.constant 0 : i32
    %c0_i32_1 = arith.constant 0 : i32
    return %c0_i32, %c0_i32_0 : i32, i32
  }
  func.func @transform_9(%arg0: i32) -> (i32, i32) {
    %c0_i32 = arith.constant 0 : i32
    %c0_i32_0 = arith.constant 0 : i32
    return %c0_i32, %arg0 : i32, i32
  }
}

</mosaic_0001>

<llo_original>
// kernel: qfunc_forward_pallas.1
$region0: #{qfunc_forward_pallas.1}
  #allocation0 [shape = 'u32[]', space=smem, size = 0x4, offset = 0x4, fixed_abs, tag = 'smem constant byte address 0x4 - core index']
  #allocation1 [shape = 'u32[144,128]{1,0:T(1,128)}', space=vmem, size = 0x12000, scoped, tag = 'internal scratch']
  #allocation2 [shape = 'f32[1,1]{1,0:T(1,128)S(6)}', space=smem, size = 0x200, scoped, tag = 'scoped memory for qfunc_forward_pallas.1']
  %s0 = inlined_call_operand.vmem [shape: bf16[32,256], index: 0, kind: input, shape index: {}]
  %s1 = inlined_call_operand.vmem [shape: bf16[128,32], index: 1, kind: input, shape index: {}]
  %s2 = inlined_call_operand.vmem [shape: f32[128,1], index: 2, kind: input, shape index: {}]
  %s3 = inlined_call_operand.vmem [shape: bf16[64,128], index: 3, kind: input, shape index: {}]
  %s4 = inlined_call_operand.vmem [shape: f32[64,1], index: 4, kind: input, shape index: {}]
  %s5 = inlined_call_operand.vmem [shape: bf16[16,64], index: 5, kind: input, shape index: {}]
  %s6 = inlined_call_operand.vmem [shape: f32[16,1], index: 6, kind: input, shape index: {}]
  %s7 = inlined_call_operand.vmem [shape: f32[16,1], index: 7, kind: input, shape index: {}]
  %s8 = inlined_call_operand.<no memory space> [shape: f32[1,1], index: 8, kind: input, shape index: {}]
  %s9 = inlined_call_operand.hbm [shape: f32[1,256], index: 9, kind: output, shape index: {}]
  %s10 = sld [smem:[#allocation0]]
  $region110: #{qfunc_forward_pallas.1} parent=0
    _
  %s12 = ssub.s32 1, %s10
  %s13 = scalar_select 0, %s12, %s10
  %14 = sst [smem:[#allocation2]] %s8
  $region1: #{qfunc_forward_pallas.1} parent=0
    #allocation3 [shape = 'u8[16384]{0}', space=vmem, size = 0x4000, scoped, tag = 'input window, operand 0']
    #allocation4 [shape = 'u8[1024]{0}', space=vmem, size = 0x400, scoped, tag = 'output window, operand 0']
    #allocation5 [shape = 's32[2]{0}', space=sflag, size = 0x8, scoped, tag = 'scoped memory for qfunc_forward_pallas.1']
    %15 = vsyncpa [#allocation5], 0
    %s16 = scalar_lea.sflag [#allocation5], 1
    %17 = vsyncpa %s16, 0
    loop: start=0, step=1, limit=4
    $region2: #{qfunc_forward_pallas.1} parent=1 // loop_pre_header
      _
    $region3: #{qfunc_forward_pallas.1} parent=1 // loop_header
      %s19 = sphi 0, %s23
      %p20 = scmp.ge.s32.totalorder %s19, 4
      %s29 = sphi 0, %s31
      %s32 = sphi 0, %s29
      %s33 = sphi 0, %s32
      %s49 = sphi 0, %s33
      %s53 = sphi 0, %s53
      %s55 = sphi 0, %s53
      %s56 = sphi 0, %s55
      %s70 = sphi 0, %s56
      %s74 = sphi 0, %s74
      %s76 = sphi 0, %s74
      %s77 = sphi 0, %s76
      %s91 = sphi 0, %s77
      %s95 = sphi 0, %s95
      %s97 = sphi 0, %s95
      %s98 = sphi 0, %s97
      %s112 = sphi 0, %s98
      %s116 = sphi 0, %s116
      %s118 = sphi 0, %s116
      %s119 = sphi 0, %s118
      %s133 = sphi 0, %s119
      %s137 = sphi 0, %s137
      %s139 = sphi 0, %s137
      %s140 = sphi 0, %s139
      %s154 = sphi 0, %s140
      %s158 = sphi 0, %s158
      %s160 = sphi 0, %s158
      %s161 = sphi 0, %s160
      %s175 = sphi 0, %s161
      %s179 = sphi 0, %s179
      %s181 = sphi 0, %s179
      %s182 = sphi 0, %s181
      %s196 = sphi 0, %s182
      %s200 = sphi 0, %s200
      %s202 = sphi 0, %s200
      %s203 = sphi 0, %s202
      %s217 = sphi 0, %s203
      %s223 = sphi 0, %s225
      %s226 = sphi 0, %s223
      %s227 = sphi 0, %s226
      %s243 = sphi 0, %s227
    $region4: #{qfunc_forward_pallas.1} parent=1 // loop_header_branch
      %22 = sbr.rel (%p20) target = $region8
    $region5: #{qfunc_forward_pallas.1} parent=1 // loop_body
      %s24 = ssub.s32 %s19, 1
      %s25 = ssub.s32 %s19, 2
      %s26 = sadd.s32 %s19, 1
      %s27 = ssub.s32 %s19, %s26
      %p28 = scmp.eq.s32.totalorder %s27, 0
      %s30 = sadd.s32 %s29, 1
      %s31 = scalar_select %p28, %s29, %s30
      %p34 = pneg %p28
      %p35 = scmp.eq.s32.totalorder %s19, 1
      %p36 = por %p34, %p35
      %p37 = scmp.ne.s32.totalorder %s29, %s32
      %p38 = scmp.eq.s32.totalorder %s19, 0
      %p39 = por %p37, %p38
      %p40 = scmp.ne.s32.totalorder %s29, %s32
      %p41 = scmp.eq.s32.totalorder %s24, 1
      %p42 = por %p40, %p41
      %p43 = scmp.ne.s32.totalorder %s32, %s33
      %p44 = scmp.eq.s32.totalorder %s24, 0
      %p45 = por %p43, %p44
      %p46 = scmp.ne.s32.totalorder %s32, %s33
      %p47 = scmp.eq.s32.totalorder %s25, 1
      %p48 = por %p46, %p47
      %p50 = scmp.ne.s32.totalorder %s33, %s49
      %p51 = scmp.eq.s32.totalorder %s25, 0
      %p52 = por %p50, %p51
      %s54 = sadd.s32 %s53, 1
      %p57 = scmp.eq.s32.totalorder %s19, 1
      %p58 = scmp.ne.s32.totalorder %s53, %s55
      %p59 = scmp.eq.s32.totalorder %s19, 0
      %p60 = por %p58, %p59
      %p61 = scmp.ne.s32.totalorder %s53, %s55
      %p62 = scmp.eq.s32.totalorder %s24, 1
      %p63 = por %p61, %p62
      %p64 = scmp.ne.s32.totalorder %s55, %s56
      %p65 = scmp.eq.s32.totalorder %s24, 0
      %p66 = por %p64, %p65
      %p67 = scmp.ne.s32.totalorder %s55, %s56
      %p68 = scmp.eq.s32.totalorder %s25, 1
      %p69 = por %p67, %p68
      %p71 = scmp.ne.s32.totalorder %s56, %s70
      %p72 = scmp.eq.s32.totalorder %s25, 0
      %p73 = por %p71, %p72
      %s75 = sadd.s32 %s74, 1
      %p78 = scmp.eq.s32.totalorder %s19, 1
      %p79 = scmp.ne.s32.totalorder %s74, %s76
      %p80 = scmp.eq.s32.totalorder %s19, 0
      %p81 = por %p79, %p80
      %p82 = scmp.ne.s32.totalorder %s74, %s76
      %p83 = scmp.eq.s32.totalorder %s24, 1
      %p84 = por %p82, %p83
      %p85 = scmp.ne.s32.totalorder %s76, %s77
      %p86 = scmp.eq.s32.totalorder %s24, 0
      %p87 = por %p85, %p86
      %p88 = scmp.ne.s32.totalorder %s76, %s77
      %p89 = scmp.eq.s32.totalorder %s25, 1
      %p90 = por %p88, %p89
      %p92 = scmp.ne.s32.totalorder %s77, %s91
      %p93 = scmp.eq.s32.totalorder %s25, 0
      %p94 = por %p92, %p93
      %s96 = sadd.s32 %s95, 1
      %p99 = scmp.eq.s32.totalorder %s19, 1
      %p100 = scmp.ne.s32.totalorder %s95, %s97
      %p101 = scmp.eq.s32.totalorder %s19, 0
      %p102 = por %p100, %p101
      %p103 = scmp.ne.s32.totalorder %s95, %s97
      %p104 = scmp.eq.s32.totalorder %s24, 1
      %p105 = por %p103, %p104
      %p106 = scmp.ne.s32.totalorder %s97, %s98
      %p107 = scmp.eq.s32.totalorder %s24, 0
      %p108 = por %p106, %p107
      %p109 = scmp.ne.s32.totalorder %s97, %s98
      %p110 = scmp.eq.s32.totalorder %s25, 1
      %p111 = por %p109, %p110
      %p113 = scmp.ne.s32.totalorder %s98, %s112
      %p114 = scmp.eq.s32.totalorder %s25, 0
      %p115 = por %p113, %p114
      %s117 = sadd.s32 %s116, 1
      %p120 = scmp.eq.s32.totalorder %s19, 1
      %p121 = scmp.ne.s32.totalorder %s116, %s118
      %p122 = scmp.eq.s32.totalorder %s19, 0
      %p123 = por %p121, %p122
      %p124 = scmp.ne.s32.totalorder %s116, %s118
      %p125 = scmp.eq.s32.totalorder %s24, 1
      %p126 = por %p124, %p125
      %p127 = scmp.ne.s32.totalorder %s118, %s119
      %p128 = scmp.eq.s32.totalorder %s24, 0
      %p129 = por %p127, %p128
      %p130 = scmp.ne.s32.totalorder %s118, %s119
      %p131 = scmp.eq.s32.totalorder %s25, 1
      %p132 = por %p130, %p131
      %p134 = scmp.ne.s32.totalorder %s119, %s133
      %p135 = scmp.eq.s32.totalorder %s25, 0
      %p136 = por %p134, %p135
      %s138 = sadd.s32 %s137, 1
      %p141 = scmp.eq.s32.totalorder %s19, 1
      %p142 = scmp.ne.s32.totalorder %s137, %s139
      %p143 = scmp.eq.s32.totalorder %s19, 0
      %p144 = por %p142, %p143
      %p145 = scmp.ne.s32.totalorder %s137, %s139
      %p146 = scmp.eq.s32.totalorder %s24, 1
      %p147 = por %p145, %p146
      %p148 = scmp.ne.s32.totalorder %s139, %s140
      %p149 = scmp.eq.s32.totalorder %s24, 0
      %p150 = por %p148, %p149
      %p151 = scmp.ne.s32.totalorder %s139, %s140
      %p152 = scmp.eq.s32.totalorder %s25, 1
      %p153 = por %p151, %p152
      %p155 = scmp.ne.s32.totalorder %s140, %s154
      %p156 = scmp.eq.s32.totalorder %s25, 0
      %p157 = por %p155, %p156
      %s159 = sadd.s32 %s158, 1
      %p162 = scmp.eq.s32.totalorder %s19, 1
      %p163 = scmp.ne.s32.totalorder %s158, %s160
      %p164 = scmp.eq.s32.totalorder %s19, 0
      %p165 = por %p163, %p164
      %p166 = scmp.ne.s32.totalorder %s158, %s160
      %p167 = scmp.eq.s32.totalorder %s24, 1
      %p168 = por %p166, %p167
      %p169 = scmp.ne.s32.totalorder %s160, %s161
      %p170 = scmp.eq.s32.totalorder %s24, 0
      %p171 = por %p169, %p170
      %p172 = scmp.ne.s32.totalorder %s160, %s161
      %p173 = scmp.eq.s32.totalorder %s25, 1
      %p174 = por %p172, %p173
      %p176 = scmp.ne.s32.totalorder %s161, %s175
      %p177 = scmp.eq.s32.totalorder %s25, 0
      %p178 = por %p176, %p177
      %s180 = sadd.s32 %s179, 1
      %p183 = scmp.eq.s32.totalorder %s19, 1
      %p184 = scmp.ne.s32.totalorder %s179, %s181
      %p185 = scmp.eq.s32.totalorder %s19, 0
      %p186 = por %p184, %p185
      %p187 = scmp.ne.s32.totalorder %s179, %s181
      %p188 = scmp.eq.s32.totalorder %s24, 1
      %p189 = por %p187, %p188
      %p190 = scmp.ne.s32.totalorder %s181, %s182
      %p191 = scmp.eq.s32.totalorder %s24, 0
      %p192 = por %p190, %p191
      %p193 = scmp.ne.s32.totalorder %s181, %s182
      %p194 = scmp.eq.s32.totalorder %s25, 1
      %p195 = por %p193, %p194
      %p197 = scmp.ne.s32.totalorder %s182, %s196
      %p198 = scmp.eq.s32.totalorder %s25, 0
      %p199 = por %p197, %p198
      %s201 = sadd.s32 %s200, 1
      %p204 = scmp.eq.s32.totalorder %s19, 1
      %p205 = scmp.ne.s32.totalorder %s200, %s202
      %p206 = scmp.eq.s32.totalorder %s19, 0
      %p207 = por %p205, %p206
      %p208 = scmp.ne.s32.totalorder %s200, %s202
      %p209 = scmp.eq.s32.totalorder %s24, 1
      %p210 = por %p208, %p209
      %p211 = scmp.ne.s32.totalorder %s202, %s203
      %p212 = scmp.eq.s32.totalorder %s24, 0
      %p213 = por %p211, %p212
      %p214 = scmp.ne.s32.totalorder %s202, %s203
      %p215 = scmp.eq.s32.totalorder %s25, 1
      %p216 = por %p214, %p215
      %p218 = scmp.ne.s32.totalorder %s203, %s217
      %p219 = scmp.eq.s32.totalorder %s25, 0
      %p220 = por %p218, %p219
      %s221 = ssub.s32 %s19, %s26
      %p222 = scmp.eq.s32.totalorder %s221, 0
      %s224 = sadd.s32 %s223, 1
      %s225 = scalar_select %p222, %s223, %s224
      %p228 = pneg %p222
      %p229 = scmp.eq.s32.totalorder %s19, 1
      %p230 = por %p228, %p229
      %p231 = scmp.ne.s32.totalorder %s223, %s226
      %p232 = scmp.eq.s32.totalorder %s19, 0
      %p233 = por %p231, %p232
      %p234 = scmp.ne.s32.totalorder %s223, %s226
      %p235 = scmp.eq.s32.totalorder %s24, 1
      %p236 = por %p234, %p235
      %p237 = scmp.ne.s32.totalorder %s226, %s227
      %p238 = scmp.eq.s32.totalorder %s24, 0
      %p239 = por %p237, %p238
      %p240 = scmp.ne.s32.totalorder %s226, %s227
      %p241 = scmp.eq.s32.totalorder %s25, 1
      %p242 = por %p240, %p241
      %p244 = scmp.ne.s32.totalorder %s227, %s243
      %p245 = scmp.eq.s32.totalorder %s25, 0
      %p246 = por %p244, %p245
      %p247 = scmp.le.s32.totalorder 1, %s19
      %p248 = scmp.lt.s32.totalorder %s19, 3
      %p249 = pnand %p247, %p248
      %p250 = pneg %p249
      // Predicated region
      $region9: #{qfunc_forward_pallas.1} parent=5 // pred_check
        _
      $region10: #{qfunc_forward_pallas.1} parent=5 // pred_check_branch
        %252 = sbr.rel (%p249) target = $region12
      $region11: #{qfunc_forward_pallas.1} parent=5 // pred_region
        %s253 = ssub.s32 %s19, 1
        // Predicated region
        $region13: #{qfunc_forward_pallas.1} parent=11 // pred_check
          %p254 = pneg %p66
        $region14: #{qfunc_forward_pallas.1} parent=11 // pred_check_branch
          %256 = sbr.rel (%p254) target = $region16
        $region15: #{qfunc_forward_pallas.1} parent=11 // pred_region
          _
        $region16: #{qfunc_forward_pallas.1} parent=11 // pred_fallthru
          _
        // Predicated region
        $region17: #{qfunc_forward_pallas.1} parent=11 // pred_check
          %p257 = pneg %p87
        $region18: #{qfunc_forward_pallas.1} parent=11 // pred_check_branch
          %259 = sbr.rel (%p257) target = $region20
        $region19: #{qfunc_forward_pallas.1} parent=11 // pred_region
          _
        $region20: #{qfunc_forward_pallas.1} parent=11 // pred_fallthru
          _
        // Predicated region
        $region21: #{qfunc_forward_pallas.1} parent=11 // pred_check
          %p260 = pneg %p108
        $region22: #{qfunc_forward_pallas.1} parent=11 // pred_check_branch
          %262 = sbr.rel (%p260) target = $region24
        $region23: #{qfunc_forward_pallas.1} parent=11 // pred_region
          _
        $region24: #{qfunc_forward_pallas.1} parent=11 // pred_fallthru
          _
        // Predicated region
        $region25: #{qfunc_forward_pallas.1} parent=11 // pred_check
          %p263 = pneg %p129
        $region26: #{qfunc_forward_pallas.1} parent=11 // pred_check_branch
          %265 = sbr.rel (%p263) target = $region28
        $region27: #{qfunc_forward_pallas.1} parent=11 // pred_region
          _
        $region28: #{qfunc_forward_pallas.1} parent=11 // pred_fallthru
          _
        // Predicated region
        $region29: #{qfunc_forward_pallas.1} parent=11 // pred_check
          %p266 = pneg %p150
        $region30: #{qfunc_forward_pallas.1} parent=11 // pred_check_branch
          %268 = sbr.rel (%p266) target = $region32
        $region31: #{qfunc_forward_pallas.1} parent=11 // pred_region
          _
        $region32: #{qfunc_forward_pallas.1} parent=11 // pred_fallthru
          _
        // Predicated region
        $region33: #{qfunc_forward_pallas.1} parent=11 // pred_check
          %p269 = pneg %p171
        $region34: #{qfunc_forward_pallas.1} parent=11 // pred_check_branch
          %271 = sbr.rel (%p269) target = $region36
        $region35: #{qfunc_forward_pallas.1} parent=11 // pred_region
          _
        $region36: #{qfunc_forward_pallas.1} parent=11 // pred_fallthru
          _
        // Predicated region
        $region37: #{qfunc_forward_pallas.1} parent=11 // pred_check
          %p272 = pneg %p192
        $region38: #{qfunc_forward_pallas.1} parent=11 // pred_check_branch
          %274 = sbr.rel (%p272) target = $region40
        $region39: #{qfunc_forward_pallas.1} parent=11 // pred_region
          _
        $region40: #{qfunc_forward_pallas.1} parent=11 // pred_fallthru
          _
        // Predicated region
        $region41: #{qfunc_forward_pallas.1} parent=11 // pred_check
          %p275 = pneg %p213
        $region42: #{qfunc_forward_pallas.1} parent=11 // pred_check_branch
          %277 = sbr.rel (%p275) target = $region44
        $region43: #{qfunc_forward_pallas.1} parent=11 // pred_region
          _
        $region44: #{qfunc_forward_pallas.1} parent=11 // pred_fallthru
          _
      $region12: #{qfunc_forward_pallas.1} parent=5 // pred_fallthru
        _
      %p278 = scmp.lt.s32.totalorder %s19, 2
      // Predicated region
      $region45: #{qfunc_forward_pallas.1} parent=5 // pred_check
        %p279 = pneg %p278
      $region46: #{qfunc_forward_pallas.1} parent=5 // pred_check_branch
        %281 = sbr.rel (%p279) target = $region48
      $region47: #{qfunc_forward_pallas.1} parent=5 // pred_region
        // Predicated region
        $region49: #{qfunc_forward_pallas.1} parent=47 // pred_check
          %p282 = pneg %p39
        $region50: #{qfunc_forward_pallas.1} parent=47 // pred_check_branch
          %284 = sbr.rel (%p282) target = $region52
        $region51: #{qfunc_forward_pallas.1} parent=47 // pred_region
          %s285 = sand.u32 %s29, 1
          %s286 = sand.u32 %s29, 1
          %s287 = smul.addr %s286, 16
          %s288 = scalar_lea.vmem [#allocation3], %s287
          %s289 = smul.addr %s19, 4
          %s290 = scalar_lea.vmem %s0, %s289
          // Predicated region
          $region53: #{qfunc_forward_pallas.1} parent=51 // pred_check
            _
          $region54: #{qfunc_forward_pallas.1} parent=51 // pred_check_branch
            %292 = sbr.rel (0) target = $region56
          $region55: #{qfunc_forward_pallas.1} parent=51 // pred_region
            // Predicated region
            $region57: #{qfunc_forward_pallas.1} parent=55 // pred_check
              _
            $region58: #{qfunc_forward_pallas.1} parent=55 // pred_check_branch
              %294 = sbr.rel target = $region60
            $region59: #{qfunc_forward_pallas.1} parent=55 // pred_region
              // Predicated region
              $region72: #{qfunc_forward_pallas.1} parent=59 // pred_check
                _
              $region73: #{qfunc_forward_pallas.1} parent=59 // pred_check_branch
                %316 = sbr.rel (0) target = $region75
              $region74: #{qfunc_forward_pallas.1} parent=59 // pred_region
                loop: start=0, step=1, limit=1
                $region76: #{qfunc_forward_pallas.1} parent=74 // loop_pre_header
                  _
                $region77: #{qfunc_forward_pallas.1} parent=74 // loop_header
                  %s318 = sphi 0, %s322
                  %p319 = scmp.ge.s32.totalorder %s318, 1
                  %s323 = sphi %s290, %s290
                  %s324 = sphi %s288, %s288
                $region78: #{qfunc_forward_pallas.1} parent=74 // loop_header_branch
                  %321 = sbr.rel (%p319) target = $region82
                $region79: #{qfunc_forward_pallas.1} parent=74 // loop_body
                  _
                $region80: #{qfunc_forward_pallas.1} parent=74 // loop_footer
                  %s322 = sadd.s32 1, %s318
                $region81: #{qfunc_forward_pallas.1} parent=74 // loop_footer_branch
                  %317 = sbr.rel target = $region77
                $region82: #{qfunc_forward_pallas.1} parent=74 // loop_exit
                  _
                %s326 = ssub.s32 16, 1
                loop: start=0, step=1, limit=1
                $region83: #{qfunc_forward_pallas.1} parent=74 // loop_pre_header
                  _
                $region84: #{qfunc_forward_pallas.1} parent=74 // loop_header
                  %s328 = sphi 0, %s332
                  %p329 = scmp.ge.s32.totalorder %s328, 1
                  %s333 = sphi %s290, %s290
                  %s334 = sphi %s288, %s288
                $region85: #{qfunc_forward_pallas.1} parent=74 // loop_header_branch
                  %331 = sbr.rel (%p329) target = $region89
                $region86: #{qfunc_forward_pallas.1} parent=74 // loop_body
                  %v335 = vld [vmem:[%s333] sm:%s326]
                  %336 = vst [vmem:[%s334] sm:%s326] %v335
                  %v337 = vld [vmem:[%s333 + $0x8] sm:%s326]
                  %338 = vst [vmem:[%s334 + $0x4] sm:%s326] %v337
                  %v339 = vld [vmem:[%s333 + $0x10] sm:%s326]
                  %340 = vst [vmem:[%s334 + $0x8] sm:%s326] %v339
                  %v341 = vld [vmem:[%s333 + $0x18] sm:%s326]
                  %342 = vst [vmem:[%s334 + $0xc] sm:%s326] %v341
                $region87: #{qfunc_forward_pallas.1} parent=74 // loop_footer
                  %s332 = sadd.s32 1, %s328
                $region88: #{qfunc_forward_pallas.1} parent=74 // loop_footer_branch
                  %327 = sbr.rel target = $region84
                $region89: #{qfunc_forward_pallas.1} parent=74 // loop_exit
                  _
              $region75: #{qfunc_forward_pallas.1} parent=59 // pred_fallthru
                _
            $region60: #{qfunc_forward_pallas.1} parent=55 // pred_fallthru
              _
            // Predicated region
            $region61: #{qfunc_forward_pallas.1} parent=55 // pred_check
              _
            $region62: #{qfunc_forward_pallas.1} parent=55 // pred_check_branch
              %296 = sbr.rel (0) target = $region64
            $region63: #{qfunc_forward_pallas.1} parent=55 // pred_region
              %s298 = ssub.s32 16, 1
              loop: start=0, step=1, limit=1
              $region65: #{qfunc_forward_pallas.1} parent=63 // loop_pre_header
                _
              $region66: #{qfunc_forward_pallas.1} parent=63 // loop_header
                %s300 = sphi 0, %s304
                %p301 = scmp.ge.s32.totalorder %s300, 1
                %s305 = sphi %s290, %s290
                %s306 = sphi %s288, %s288
              $region67: #{qfunc_forward_pallas.1} parent=63 // loop_header_branch
                %303 = sbr.rel (%p301) target = $region71
              $region68: #{qfunc_forward_pallas.1} parent=63 // loop_body
                %v307 = vld [vmem:[%s305] sm:%s298]
                %308 = vst [vmem:[%s306] sm:%s298] %v307
                %v309 = vld [vmem:[%s305 + $0x8] sm:%s298]
                %310 = vst [vmem:[%s306 + $0x4] sm:%s298] %v309
                %v311 = vld [vmem:[%s305 + $0x10] sm:%s298]
                %312 = vst [vmem:[%s306 + $0x8] sm:%s298] %v311
                %v313 = vld [vmem:[%s305 + $0x18] sm:%s298]
                %314 = vst [vmem:[%s306 + $0xc] sm:%s298] %v313
              $region69: #{qfunc_forward_pallas.1} parent=63 // loop_footer
                %s304 = sadd.s32 1, %s300
              $region70: #{qfunc_forward_pallas.1} parent=63 // loop_footer_branch
                %299 = sbr.rel target = $region66
              $region71: #{qfunc_forward_pallas.1} parent=63 // loop_exit
                _
            $region64: #{qfunc_forward_pallas.1} parent=55 // pred_fallthru
              _
          $region56: #{qfunc_forward_pallas.1} parent=51 // pred_fallthru
            _
          %343 = vnop
        $region52: #{qfunc_forward_pallas.1} parent=47 // pred_fallthru
          _
      $region48: #{qfunc_forward_pallas.1} parent=5 // pred_fallthru
        _
      %p344 = scmp.le.s32.totalorder 1, %s19
      %p345 = scmp.lt.s32.totalorder %s19, 3
      %p346 = pnand %p344, %p345
      %p347 = pneg %p346
      // Predicated region
      $region90: #{qfunc_forward_pallas.1} parent=5 // pred_check
        _
      $region91: #{qfunc_forward_pallas.1} parent=5 // pred_check_branch
        %349 = sbr.rel (%p346) target = $region93
      $region92: #{qfunc_forward_pallas.1} parent=5 // pred_region
        %s350 = ssub.s32 %s19, 1
        %s351 = sand.u32 %s32, 1
        %s352 = sand.u32 %s32, 1
        %s353 = smul.addr %s352, 16
        %s354 = scalar_lea.vmem [#allocation3], %s353
        // Predicated region
        $region94: #{qfunc_forward_pallas.1} parent=92 // pred_check
          %p355 = pneg %p45
        $region95: #{qfunc_forward_pallas.1} parent=92 // pred_check_branch
          %357 = sbr.rel (%p355) target = $region97
        $region96: #{qfunc_forward_pallas.1} parent=92 // pred_region
          _
        $region97: #{qfunc_forward_pallas.1} parent=92 // pred_fallthru
          _
        %s358 = sand.u32 %s32, 1
        %s359 = sand.u32 %s32, 1
        %s360 = smul.addr %s359, 16
        %s361 = scalar_lea.vmem [#allocation3], %s360
        %p362 = pneg %p45
        %p363 = pneg %p42
        %p364 = pneg %p66
        %p365 = pneg %p63
        %p366 = pneg %p87
        %p367 = pneg %p84
        %p368 = pneg %p108
        %p369 = pneg %p105
        %p370 = pneg %p129
        %p371 = pneg %p126
        %p372 = pneg %p150
        %p373 = pneg %p147
        %p374 = pneg %p171
        %p375 = pneg %p168
        %p376 = pneg %p192
        %p377 = pneg %p189
        %p378 = pneg %p213
        %p379 = pneg %p210
        %p380 = pneg %p239
        %p381 = pneg %p236
        %s382 = sand.u32 %s226, 1
        %s383 = scalar_lea.sflag [#allocation5], %s382
        %s384 = sand.u32 %s226, 1
        %s385 = scalar_lea.vmem [#allocation4], %s384
        %v387 = vld [vmem:[%s354] sm:$0xf]
        %v388 = vld [vmem:[%s354 + $0x4] sm:$0xf]
        %v389 = vld [vmem:[%s354 + $0x8] sm:$0xf]
        %v390 = vld [vmem:[%s354 + $0xc] sm:$0xf]
        %v391 = vld [vmem:[%s1] sm:$0xf]
        %v392 = vld [vmem:[%s1 + $0x4] sm:$0xf]
        %v393 = vld [vmem:[%s1 + $0x8] sm:$0xf]
        %v394 = vld [vmem:[%s1 + $0xc] sm:$0xf]
        %v395 = vld [vmem:[%s1 + $0x10] sm:$0xf]
        %v396 = vld [vmem:[%s1 + $0x14] sm:$0xf]
        %v397 = vld [vmem:[%s1 + $0x18] sm:$0xf]
        %v398 = vld [vmem:[%s1 + $0x1c] sm:$0xf]
        %v399 = vld [vmem:[%s1 + $0x20] sm:$0xf]
        %v400 = vld [vmem:[%s1 + $0x24] sm:$0xf]
        %v401 = vld [vmem:[%s1 + $0x28] sm:$0xf]
        %v402 = vld [vmem:[%s1 + $0x2c] sm:$0xf]
        %v403 = vld [vmem:[%s1 + $0x30] sm:$0xf]
        %v404 = vld [vmem:[%s1 + $0x34] sm:$0xf]
        %v405 = vld [vmem:[%s1 + $0x38] sm:$0xf]
        %v406 = vld [vmem:[%s1 + $0x3c] sm:$0xf]
        %v407 = vld [vmem:[%s2] sm:$0xff]
        %v408 = vld [vmem:[%s2 + $0x8] sm:$0xff]
        %v409 = vld [vmem:[%s2 + $0x10] sm:$0xff]
        %v410 = vld [vmem:[%s2 + $0x18] sm:$0xff]
        %v411 = vld [vmem:[%s2 + $0x20] sm:$0xff]
        %v412 = vld [vmem:[%s2 + $0x28] sm:$0xff]
        %v413 = vld [vmem:[%s2 + $0x30] sm:$0xff]
        %v414 = vld [vmem:[%s2 + $0x38] sm:$0xff]
        %v415 = vld [vmem:[%s2 + $0x40] sm:$0xff]
        %v416 = vld [vmem:[%s2 + $0x48] sm:$0xff]
        %v417 = vld [vmem:[%s2 + $0x50] sm:$0xff]
        %v418 = vld [vmem:[%s2 + $0x58] sm:$0xff]
        %v419 = vld [vmem:[%s2 + $0x60] sm:$0xff]
        %v420 = vld [vmem:[%s2 + $0x68] sm:$0xff]
        %v421 = vld [vmem:[%s2 + $0x70] sm:$0xff]
        %v422 = vld [vmem:[%s2 + $0x78] sm:$0xff]
        %424 = vset.pattern.permute.xlu0 0
        %425 = vperm.xlu0 %424, %v407
        %v426 = vpop.permute.xlu0 %425
        %429 = vset.pattern.permute.xlu0 0
        %430 = vperm.xlu0 %429, %v408
        %v431 = vpop.permute.xlu0 %430
        %434 = vset.pattern.permute.xlu0 0
        %435 = vperm.xlu0 %434, %v409
        %v436 = vpop.permute.xlu0 %435
        %439 = vset.pattern.permute.xlu0 0
        %440 = vperm.xlu0 %439, %v410
        %v441 = vpop.permute.xlu0 %440
        %444 = vset.pattern.permute.xlu0 0
        %445 = vperm.xlu0 %444, %v411
        %v446 = vpop.permute.xlu0 %445
        %449 = vset.pattern.permute.xlu0 0
        %450 = vperm.xlu0 %449, %v412
        %v451 = vpop.permute.xlu0 %450
        %454 = vset.pattern.permute.xlu0 0
        %455 = vperm.xlu0 %454, %v413
        %v456 = vpop.permute.xlu0 %455
        %459 = vset.pattern.permute.xlu0 0
        %460 = vperm.xlu0 %459, %v414
        %v461 = vpop.permute.xlu0 %460
        %464 = vset.pattern.permute.xlu0 0
        %465 = vperm.xlu0 %464, %v415
        %v466 = vpop.permute.xlu0 %465
        %469 = vset.pattern.permute.xlu0 0
        %470 = vperm.xlu0 %469, %v416
        %v471 = vpop.permute.xlu0 %470
        %474 = vset.pattern.permute.xlu0 0
        %475 = vperm.xlu0 %474, %v417
        %v476 = vpop.permute.xlu0 %475
        %479 = vset.pattern.permute.xlu0 0
        %480 = vperm.xlu0 %479, %v418
        %v481 = vpop.permute.xlu0 %480
        %484 = vset.pattern.permute.xlu0 0
        %485 = vperm.xlu0 %484, %v419
        %v486 = vpop.permute.xlu0 %485
        %489 = vset.pattern.permute.xlu0 0
        %490 = vperm.xlu0 %489, %v420
        %v491 = vpop.permute.xlu0 %490
        %494 = vset.pattern.permute.xlu0 0
        %495 = vperm.xlu0 %494, %v421
        %v496 = vpop.permute.xlu0 %495
        %499 = vset.pattern.permute.xlu0 0
        %500 = vperm.xlu0 %499, %v422
        %v501 = vpop.permute.xlu0 %500
        %v519 = vunpack.c.l.b16 %v391
        %v520 = vunpack.c.l.b16 %v392
        %v521 = vunpack.c.l.b16 %v393
        %v522 = vunpack.c.l.b16 %v394
        %v523 = vunpack.c.l.b16 %v395
        %v524 = vunpack.c.l.b16 %v396
        %v525 = vunpack.c.l.b16 %v397
        %v526 = vunpack.c.l.b16 %v398
        %v527 = vunpack.c.l.b16 %v399
        %v528 = vunpack.c.l.b16 %v400
        %v529 = vunpack.c.l.b16 %v401
        %v530 = vunpack.c.l.b16 %v402
        %v531 = vunpack.c.l.b16 %v403
        %v532 = vunpack.c.l.b16 %v404
        %v533 = vunpack.c.l.b16 %v405
        %v534 = vunpack.c.l.b16 %v406
        %v535 = vpack.c.b16 %v520, %v519
        %v536 = vpack.c.b16 %v522, %v521
        %v537 = vpack.c.b16 %v524, %v523
        %v538 = vpack.c.b16 %v526, %v525
        %v539 = vpack.c.b16 %v528, %v527
        %v540 = vpack.c.b16 %v530, %v529
        %v541 = vpack.c.b16 %v532, %v531
        %v542 = vpack.c.b16 %v534, %v533
        %v547 = vunpack.c.l.b16 %v387
        %v548 = vunpack.c.l.b16 %v388
        %v549 = vunpack.c.l.b16 %v389
        %v550 = vunpack.c.l.b16 %v390
        %v551 = vpack.c.b16 %v548, %v547
        %v552 = vpack.c.b16 %v550, %v549
        %vm555 = vcmask 261120
        %v557 = vsel %vm555, %v535, 0
        %v560 = vsel %vm555, %v536, 0
        %v563 = vsel %vm555, %v537, 0
        %v566 = vsel %vm555, %v538, 0
        %v569 = vsel %vm555, %v539, 0
        %v572 = vsel %vm555, %v540, 0
        %v575 = vsel %vm555, %v541, 0
        %v578 = vsel %vm555, %v542, 0
        %580 = vmatprep.subr.bf16.mxu0 0
        %581 = vmatpush1.bf16.msra.mxu0 0
        %582 = vmatprep.subr.bf16.mxu0 0
        %583 = vmatpush1.bf16.msra.mxu0 0
        %584 = vmatprep.subr.bf16.mxu0 0
        %585 = vmatpush1.bf16.msra.mxu0 0
        %586 = vmatprep.subr.bf16.mxu0 0
        %587 = vmatpush1.bf16.msra.mxu0 0
        %588 = vmatprep.subr.bf16.mxu0 0
        %589 = vmatpush1.bf16.msra.mxu0 0
        %590 = vmatprep.subr.bf16.mxu0 0
        %591 = vmatpush1.bf16.msra.mxu0 0
        %592 = vmatprep.subr.bf16.mxu0 0
        %593 = vmatpush1.bf16.msra.mxu0 %v552
        %594 = vmatprep.subr.bf16.mxu0 0
        %595 = vmatpush1.bf16.msra.mxu0 %v551
        %596 = vmatprep.subr.bf16.mxu0 0
        %597 = vmatpush2.bf16.msra.mxu0 0
        %598 = vmatprep.subr.bf16.mxu0 0
        %599 = vmatpush2.bf16.msra.mxu0 0
        %600 = vmatprep.subr.bf16.mxu0 0
        %601 = vmatpush2.bf16.msra.mxu0 0
        %602 = vmatprep.subr.bf16.mxu0 0
        %603 = vmatpush2.bf16.msra.mxu0 0
        %604 = vmatprep.subr.bf16.mxu0 0
        %605 = vmatpush2.bf16.msra.mxu0 0
        %606 = vmatprep.subr.bf16.mxu0 0
        %607 = vmatpush2.bf16.msra.mxu0 0
        %608 = vmatprep.subr.bf16.mxu0 0
        %609 = vmatpush2.bf16.msra.mxu0 0
        %610 = vmatprep.subr.bf16.mxu0 0
        %611 = vmatpush2.bf16.msra.mxu0 0
        %612 = vmatprep.mubr.bf16.mxu0 0
        %613 = vmatmul.mubr.bf16.gmra.mxu0 %v557
        %v614 = vpop.f32.mrf.mxu0
        %v615 = vadd.f32 %v426, %v614
        %v616 = vpop.f32.mrf.mxu0
        %v617 = vpop.f32.mrf.mxu0
        %v618 = vadd.f32 %v431, %v617
        %v619 = vpop.f32.mrf.mxu0
        %620 = vmatprep.mubr.bf16.mxu0 0
        %621 = vmatmul.mubr.bf16.gmra.mxu0 %v560
        %v622 = vpop.f32.mrf.mxu0
        %v623 = vadd.f32 %v436, %v622
        %v624 = vpop.f32.mrf.mxu0
        %v625 = vpop.f32.mrf.mxu0
        %v626 = vadd.f32 %v441, %v625
        %v627 = vpop.f32.mrf.mxu0
        %628 = vmatprep.mubr.bf16.mxu0 0
        %629 = vmatmul.mubr.bf16.gmra.mxu0 %v563
        %v630 = vpop.f32.mrf.mxu0
        %v631 = vadd.f32 %v446, %v630
        %v632 = vpop.f32.mrf.mxu0
        %v633 = vpop.f32.mrf.mxu0
        %v634 = vadd.f32 %v451, %v633
        %v635 = vpop.f32.mrf.mxu0
        %636 = vmatprep.mubr.bf16.mxu0 0
        %637 = vmatmul.mubr.bf16.gmra.mxu0 %v566
        %v638 = vpop.f32.mrf.mxu0
        %v639 = vadd.f32 %v456, %v638
        %v640 = vpop.f32.mrf.mxu0
        %v641 = vpop.f32.mrf.mxu0
        %v642 = vadd.f32 %v461, %v641
        %v643 = vpop.f32.mrf.mxu0
        %644 = vmatprep.mubr.bf16.mxu0 0
        %645 = vmatmul.mubr.bf16.gmra.mxu0 %v569
        %v646 = vpop.f32.mrf.mxu0
        %v647 = vadd.f32 %v466, %v646
        %v648 = vpop.f32.mrf.mxu0
        %v649 = vpop.f32.mrf.mxu0
        %v650 = vadd.f32 %v471, %v649
        %v651 = vpop.f32.mrf.mxu0
        %652 = vmatprep.mubr.bf16.mxu0 0
        %653 = vmatmul.mubr.bf16.gmra.mxu0 %v572
        %v654 = vpop.f32.mrf.mxu0
        %v655 = vadd.f32 %v476, %v654
        %v656 = vpop.f32.mrf.mxu0
        %v657 = vpop.f32.mrf.mxu0
        %v658 = vadd.f32 %v481, %v657
        %v659 = vpop.f32.mrf.mxu0
        %660 = vmatprep.mubr.bf16.mxu0 0
        %661 = vmatmul.mubr.bf16.gmra.mxu0 %v575
        %v662 = vpop.f32.mrf.mxu0
        %v663 = vadd.f32 %v486, %v662
        %v664 = vpop.f32.mrf.mxu0
        %v665 = vpop.f32.mrf.mxu0
        %v666 = vadd.f32 %v491, %v665
        %v667 = vpop.f32.mrf.mxu0
        %668 = vmatprep.mubr.bf16.mxu0 0
        %669 = vmatmul.mubr.bf16.gmra.mxu0 %v578
        %v670 = vpop.f32.mrf.mxu0
        %v671 = vadd.f32 %v496, %v670
        %v672 = vpop.f32.mrf.mxu0
        %v673 = vpop.f32.mrf.mxu0
        %v674 = vadd.f32 %v501, %v673
        %v675 = vpop.f32.mrf.mxu0
        %676 = vdwg.mxu0
        %v677 = vmax.f32 %v615, 0.0
        %v678 = vmax.f32 %v618, 0.0
        %v679 = vmax.f32 %v623, 0.0
        %v680 = vmax.f32 %v626, 0.0
        %v681 = vmax.f32 %v631, 0.0
        %v682 = vmax.f32 %v634, 0.0
        %v683 = vmax.f32 %v639, 0.0
        %v684 = vmax.f32 %v642, 0.0
        %v685 = vmax.f32 %v647, 0.0
        %v686 = vmax.f32 %v650, 0.0
        %v687 = vmax.f32 %v655, 0.0
        %v688 = vmax.f32 %v658, 0.0
        %v689 = vmax.f32 %v663, 0.0
        %v690 = vmax.f32 %v666, 0.0
        %v691 = vmax.f32 %v671, 0.0
        %v692 = vmax.f32 %v674, 0.0
        %v693 = vpack.c.bf16 %v678, %v677
        %v694 = vpack.c.bf16 %v680, %v679
        %v695 = vpack.c.bf16 %v682, %v681
        %v696 = vpack.c.bf16 %v684, %v683
        %v697 = vpack.c.bf16 %v686, %v685
        %v698 = vpack.c.bf16 %v688, %v687
        %v699 = vpack.c.bf16 %v690, %v689
        %v700 = vpack.c.bf16 %v692, %v691
        %v701 = vld [vmem:[%s3] sm:$0xf]
        %v702 = vld [vmem:[%s3 + $0x4] sm:$0xf]
        %v703 = vld [vmem:[%s3 + $0x8] sm:$0xf]
        %v704 = vld [vmem:[%s3 + $0xc] sm:$0xf]
        %v705 = vld [vmem:[%s3 + $0x10] sm:$0xf]
        %v706 = vld [vmem:[%s3 + $0x14] sm:$0xf]
        %v707 = vld [vmem:[%s3 + $0x18] sm:$0xf]
        %v708 = vld [vmem:[%s3 + $0x1c] sm:$0xf]
        %v709 = vld [vmem:[%s4] sm:$0xff]
        %v710 = vld [vmem:[%s4 + $0x8] sm:$0xff]
        %v711 = vld [vmem:[%s4 + $0x10] sm:$0xff]
        %v712 = vld [vmem:[%s4 + $0x18] sm:$0xff]
        %v713 = vld [vmem:[%s4 + $0x20] sm:$0xff]
        %v714 = vld [vmem:[%s4 + $0x28] sm:$0xff]
        %v715 = vld [vmem:[%s4 + $0x30] sm:$0xff]
        %v716 = vld [vmem:[%s4 + $0x38] sm:$0xff]
        %718 = vset.pattern.permute.xlu0 0
        %719 = vperm.xlu0 %718, %v709
        %v720 = vpop.permute.xlu0 %719
        %723 = vset.pattern.permute.xlu0 0
        %724 = vperm.xlu0 %723, %v710
        %v725 = vpop.permute.xlu0 %724
        %728 = vset.pattern.permute.xlu0 0
        %729 = vperm.xlu0 %728, %v711
        %v730 = vpop.permute.xlu0 %729
        %733 = vset.pattern.permute.xlu0 0
        %734 = vperm.xlu0 %733, %v712
        %v735 = vpop.permute.xlu0 %734
        %738 = vset.pattern.permute.xlu0 0
        %739 = vperm.xlu0 %738, %v713
        %v740 = vpop.permute.xlu0 %739
        %743 = vset.pattern.permute.xlu0 0
        %744 = vperm.xlu0 %743, %v714
        %v745 = vpop.permute.xlu0 %744
        %748 = vset.pattern.permute.xlu0 0
        %749 = vperm.xlu0 %748, %v715
        %v750 = vpop.permute.xlu0 %749
        %753 = vset.pattern.permute.xlu0 0
        %754 = vperm.xlu0 %753, %v716
        %v755 = vpop.permute.xlu0 %754
        %v765 = vunpack.c.l.b16 %v701
        %v766 = vunpack.c.l.b16 %v702
        %v767 = vunpack.c.l.b16 %v703
        %v768 = vunpack.c.l.b16 %v704
        %v769 = vunpack.c.l.b16 %v705
        %v770 = vunpack.c.l.b16 %v706
        %v771 = vunpack.c.l.b16 %v707
        %v772 = vunpack.c.l.b16 %v708
        %v773 = vpack.c.b16 %v766, %v765
        %v774 = vpack.c.b16 %v768, %v767
        %v775 = vpack.c.b16 %v770, %v769
        %v776 = vpack.c.b16 %v772, %v771
        %781 = vmatprep.subr.bf16.mxu0 0
        %782 = vmatpush1.bf16.msra.mxu0 %v700
        %783 = vmatprep.subr.bf16.mxu0 0
        %784 = vmatpush1.bf16.msra.mxu0 %v699
        %785 = vmatprep.subr.bf16.mxu0 0
        %786 = vmatpush1.bf16.msra.mxu0 %v698
        %787 = vmatprep.subr.bf16.mxu0 0
        %788 = vmatpush1.bf16.msra.mxu0 %v697
        %789 = vmatprep.subr.bf16.mxu0 0
        %790 = vmatpush1.bf16.msra.mxu0 %v696
        %791 = vmatprep.subr.bf16.mxu0 0
        %792 = vmatpush1.bf16.msra.mxu0 %v695
        %793 = vmatprep.subr.bf16.mxu0 0
        %794 = vmatpush1.bf16.msra.mxu0 %v694
        %795 = vmatprep.subr.bf16.mxu0 0
        %796 = vmatpush1.bf16.msra.mxu0 %v693
        %797 = vmatprep.subr.bf16.mxu0 0
        %798 = vmatpush2.bf16.msra.mxu0 0
        %799 = vmatprep.subr.bf16.mxu0 0
        %800 = vmatpush2.bf16.msra.mxu0 0
        %801 = vmatprep.subr.bf16.mxu0 0
        %802 = vmatpush2.bf16.msra.mxu0 0
        %803 = vmatprep.subr.bf16.mxu0 0
        %804 = vmatpush2.bf16.msra.mxu0 0
        %805 = vmatprep.subr.bf16.mxu0 0
        %806 = vmatpush2.bf16.msra.mxu0 0
        %807 = vmatprep.subr.bf16.mxu0 0
        %808 = vmatpush2.bf16.msra.mxu0 0
        %809 = vmatprep.subr.bf16.mxu0 0
        %810 = vmatpush2.bf16.msra.mxu0 0
        %811 = vmatprep.subr.bf16.mxu0 0
        %812 = vmatpush2.bf16.msra.mxu0 0
        %813 = vmatprep.mubr.bf16.mxu0 0
        %814 = vmatmul.mubr.bf16.gmra.mxu0 %v773
        %v815 = vpop.f32.mrf.mxu0
        %v816 = vadd.f32 %v720, %v815
        %v817 = vpop.f32.mrf.mxu0
        %v818 = vpop.f32.mrf.mxu0
        %v819 = vadd.f32 %v725, %v818
        %v820 = vpop.f32.mrf.mxu0
        %821 = vmatprep.mubr.bf16.mxu0 0
        %822 = vmatmul.mubr.bf16.gmra.mxu0 %v774
        %v823 = vpop.f32.mrf.mxu0
        %v824 = vadd.f32 %v730, %v823
        %v825 = vpop.f32.mrf.mxu0
        %v826 = vpop.f32.mrf.mxu0
        %v827 = vadd.f32 %v735, %v826
        %v828 = vpop.f32.mrf.mxu0
        %829 = vmatprep.mubr.bf16.mxu0 0
        %830 = vmatmul.mubr.bf16.gmra.mxu0 %v775
        %v831 = vpop.f32.mrf.mxu0
        %v832 = vadd.f32 %v740, %v831
        %v833 = vpop.f32.mrf.mxu0
        %v834 = vpop.f32.mrf.mxu0
        %v835 = vadd.f32 %v745, %v834
        %v836 = vpop.f32.mrf.mxu0
        %837 = vmatprep.mubr.bf16.mxu0 0
        %838 = vmatmul.mubr.bf16.gmra.mxu0 %v776
        %v839 = vpop.f32.mrf.mxu0
        %v840 = vadd.f32 %v750, %v839
        %v841 = vpop.f32.mrf.mxu0
        %v842 = vpop.f32.mrf.mxu0
        %v843 = vadd.f32 %v755, %v842
        %v844 = vpop.f32.mrf.mxu0
        %845 = vdwg.mxu0
        %v846 = vmax.f32 %v816, 0.0
        %v847 = vmax.f32 %v819, 0.0
        %v848 = vmax.f32 %v824, 0.0
        %v849 = vmax.f32 %v827, 0.0
        %v850 = vmax.f32 %v832, 0.0
        %v851 = vmax.f32 %v835, 0.0
        %v852 = vmax.f32 %v840, 0.0
        %v853 = vmax.f32 %v843, 0.0
        %v854 = vpack.c.bf16 %v847, %v846
        %v855 = vpack.c.bf16 %v849, %v848
        %v856 = vpack.c.bf16 %v851, %v850
        %v857 = vpack.c.bf16 %v853, %v852
        %v858 = vld [vmem:[%s5] sm:$0xf]
        %v859 = vld [vmem:[%s5 + $0x4] sm:$0xf]
        %v860 = vld [vmem:[%s6] sm:$0xff]
        %v861 = vld [vmem:[%s6 + $0x8] sm:$0xff]
        %863 = vset.pattern.permute.xlu0 0
        %864 = vperm.xlu0 %863, %v860
        %v865 = vpop.permute.xlu0 %864
        %868 = vset.pattern.permute.xlu0 0
        %869 = vperm.xlu0 %868, %v861
        %v870 = vpop.permute.xlu0 %869
        %v874 = vunpack.c.l.b16 %v858
        %v875 = vunpack.c.l.b16 %v859
        %v876 = vpack.c.b16 %v875, %v874
        %vm877 = vcmask 523264
        %v879 = vsel %vm877, %v876, 0
        %881 = vmatprep.subr.bf16.mxu0 0
        %882 = vmatpush1.bf16.msra.mxu0 0
        %883 = vmatprep.subr.bf16.mxu0 0
        %884 = vmatpush1.bf16.msra.mxu0 0
        %885 = vmatprep.subr.bf16.mxu0 0
        %886 = vmatpush1.bf16.msra.mxu0 0
        %887 = vmatprep.subr.bf16.mxu0 0
        %888 = vmatpush1.bf16.msra.mxu0 0
        %889 = vmatprep.subr.bf16.mxu0 0
        %890 = vmatpush1.bf16.msra.mxu0 %v857
        %891 = vmatprep.subr.bf16.mxu0 0
        %892 = vmatpush1.bf16.msra.mxu0 %v856
        %893 = vmatprep.subr.bf16.mxu0 0
        %894 = vmatpush1.bf16.msra.mxu0 %v855
        %895 = vmatprep.subr.bf16.mxu0 0
        %896 = vmatpush1.bf16.msra.mxu0 %v854
        %897 = vmatprep.subr.bf16.mxu0 0
        %898 = vmatpush2.bf16.msra.mxu0 0
        %899 = vmatprep.subr.bf16.mxu0 0
        %900 = vmatpush2.bf16.msra.mxu0 0
        %901 = vmatprep.subr.bf16.mxu0 0
        %902 = vmatpush2.bf16.msra.mxu0 0
        %903 = vmatprep.subr.bf16.mxu0 0
        %904 = vmatpush2.bf16.msra.mxu0 0
        %905 = vmatprep.subr.bf16.mxu0 0
        %906 = vmatpush2.bf16.msra.mxu0 0
        %907 = vmatprep.subr.bf16.mxu0 0
        %908 = vmatpush2.bf16.msra.mxu0 0
        %909 = vmatprep.subr.bf16.mxu0 0
        %910 = vmatpush2.bf16.msra.mxu0 0
        %911 = vmatprep.subr.bf16.mxu0 0
        %912 = vmatpush2.bf16.msra.mxu0 0
        %913 = vmatprep.mubr.bf16.mxu0 0
        %914 = vmatmul.mubr.bf16.gmra.mxu0 %v879
        %v915 = vpop.f32.mrf.mxu0
        %v916 = vadd.f32 %v865, %v915
        %v917 = vpop.f32.mrf.mxu0
        %v918 = vpop.f32.mrf.mxu0
        %v919 = vadd.f32 %v870, %v918
        %v920 = vpop.f32.mrf.mxu0
        %921 = vdwg.mxu0
        %v922 = vmax.f32 %v916, 0.0
        %v923 = vmax.f32 %v919, 0.0
        %v924 = vld [vmem:[%s7] sm:$0xff]
        %v925 = vld [vmem:[%s7 + $0x8] sm:$0xff]
        %927 = vset.pattern.permute.xlu0 0
        %928 = vperm.xlu0 %927, %v924
        %v929 = vpop.permute.xlu0 %928
        %932 = vset.pattern.permute.xlu0 0
        %933 = vperm.xlu0 %932, %v925
        %v934 = vpop.permute.xlu0 %933
        %v936 = vmul.f32 %v922, %v929
        %v937 = vmul.f32 %v923, %v934
        %v938 = vadd.f32 %v936, %v937
        %v939 = vrot.slane %v938, 4
        %v940 = vadd.f32 %v938, %v939
        %v941 = vrot.slane %v940, 2
        %v942 = vadd.f32 %v940, %v941
        %v943 = vrot.slane %v942, 1
        %v944 = vadd.f32 %v942, %v943
        %s945 = sld [smem:[#allocation2]]
        %v946 = vstv %s945
        %v947 = vadd.f32 %v944, %v946
        %948 = vst [vmem:[%s385] sm:$0x1] %v947
        %s949 = sand.u32 %s226, 1
        %s950 = scalar_lea.sflag [#allocation5], %s949
        %s951 = sand.u32 %s226, 1
        %s952 = scalar_lea.vmem [#allocation4], %s951
        // Predicated region
        $region98: #{qfunc_forward_pallas.1} parent=92 // pred_check
          %p953 = pneg %p236
        $region99: #{qfunc_forward_pallas.1} parent=92 // pred_check_branch
          %955 = sbr.rel (%p953) target = $region101
        $region100: #{qfunc_forward_pallas.1} parent=92 // pred_region
          %s957 = ssub.s32 16, 16
          %958 = vsyncadd %s950, %s957
          %s959 = smul.addr %s24, 16
          %s960 = scalar_lea.hbm %s9, %s959
          %s962 = sshll.u32 %s952, 4
          %s963 = int_to_ptr.vmem [resolvable:$true] %s962
          %965 = dma.vmem_to_hbm [thread:$0]  %s963, 16, %s960, %s950
        $region101: #{qfunc_forward_pallas.1} parent=92 // pred_fallthru
          _
      $region93: #{qfunc_forward_pallas.1} parent=5 // pred_fallthru
        _
      %p966 = scmp.le.s32.totalorder 2, %s19
      // Predicated region
      $region102: #{qfunc_forward_pallas.1} parent=5 // pred_check
        %p967 = pneg %p966
      $region103: #{qfunc_forward_pallas.1} parent=5 // pred_check_branch
        %969 = sbr.rel (%p967) target = $region105
      $region104: #{qfunc_forward_pallas.1} parent=5 // pred_region
        %s970 = ssub.s32 %s19, 2
        // Predicated region
        $region106: #{qfunc_forward_pallas.1} parent=104 // pred_check
          %p971 = pneg %p242
        $region107: #{qfunc_forward_pallas.1} parent=104 // pred_check_branch
          %973 = sbr.rel (%p971) target = $region109
        $region108: #{qfunc_forward_pallas.1} parent=104 // pred_region
          %s974 = sand.u32 %s227, 1
          %s975 = scalar_lea.sflag [#allocation5], %s974
          %s976 = sand.u32 %s227, 1
          %s977 = scalar_lea.vmem [#allocation4], %s976
          %978 = dma.done %s975, 16
        $region109: #{qfunc_forward_pallas.1} parent=104 // pred_fallthru
          _
      $region105: #{qfunc_forward_pallas.1} parent=5 // pred_fallthru
        _
    $region6: #{qfunc_forward_pallas.1} parent=1 // loop_footer
      %s23 = sadd.s32 1, %s19
    $region7: #{qfunc_forward_pallas.1} parent=1 // loop_footer_branch
      %18 = sbr.rel target = $region3
    $region8: #{qfunc_forward_pallas.1} parent=1 // loop_exit
      _
    %979 = vsyncpa [#allocation5], 1
    %s980 = scalar_lea.sflag [#allocation5], 1
    %981 = vsyncpa %s980, 1

</llo_original>
